<compile_context>
chip_gen: v6e
topology: v6e:2x2x1
jax: 0.10.0
libtpu: 0.0.40
codegen_flags: <defaults>
</compile_context>

<pallas_src>
import math

import jax
import jax.numpy as jnp
from jax.experimental import pallas as pl
from jax.experimental.pallas import tpu as pltpu

LANE = 128  # lane width; class columns are padded to a multiple of this


def _round_up(x, m):
    return ((x + m - 1) // m) * m


def _pick_tile_h(H, max_rows=128):
    """Largest divisor of H that is <= max_rows and leaves >= 2 row tiles (megacore)."""
    best = H
    for t in range(1, H + 1):
        if H % t == 0 and t <= max_rows and (H // t) >= 2:
            best = t
    return best


# ----------------------------------------------------------------------------- #
# Kernel 1: fused Convolution (block-Toeplitz matmul) + BatchNormInference + Add
#           + ReLU, reading the padded NHWC input directly (no im2col in HBM)
# ----------------------------------------------------------------------------- #
def conv_bn_add_relu_kernel(x_ref, t_ref, shift_ref, o_ref):
    # x_ref:     (tile_h+2, (W+2)*Cin)   bf16  haloed NHWC row tile, (w, ci) in lanes
    # t_ref:     (3, (W+2)*Cin, W*Cout)  bf16  BN-scale-folded block-Toeplitz conv weight
    # shift_ref: (1, W*Cout)             f32   beta - mean*scale + add_bias, tiled over w
    # o_ref:     (tile_h, W*Cout)        bf16  conv+BN+Add+ReLU output, NHWC flatten order
    th = o_ref.shape[0]
    x = x_ref[...]
    m0 = jnp.dot(x, t_ref[0], preferred_element_type=jnp.float32)
    m1 = jnp.dot(x, t_ref[1], preferred_element_type=jnp.float32)
    m2 = jnp.dot(x, t_ref[2], preferred_element_type=jnp.float32)
    # Output row i needs padded input rows i, i+1, i+2 -> shift the f32 results
    # (cheap on unpacked registers) rather than the packed bf16 input block.
    acc = m0[0:th, :] + m1[1:th + 1, :] + m2[2:th + 2, :]
    o_ref[...] = jnp.maximum(acc + shift_ref[...], 0.0).astype(o_ref.dtype)


def conv_bn_add_relu(x_tiles, t_w, shift_tiled, *, H, tile_h):
    N, n_rt, th2, KL = x_tiles.shape
    _, _, WC = t_w.shape
    return pl.pallas_call(
        conv_bn_add_relu_kernel,
        out_shape=jax.ShapeDtypeStruct((N * H, WC), jnp.bfloat16),
        grid_spec=pltpu.PrefetchScalarGridSpec(
            num_scalar_prefetch=0,
            grid=(N, n_rt),
            in_specs=[
                pl.BlockSpec((None, None, th2, KL), lambda n, r: (n, r, 0, 0)),
                pl.BlockSpec((3, KL, WC), lambda n, r: (0, 0, 0)),
                pl.BlockSpec((1, WC), lambda n, r: (0, 0)),
            ],
            out_specs=pl.BlockSpec((tile_h, WC), lambda n, r: (n * n_rt + r, 0)),
        ),
        compiler_params=pltpu.CompilerParams(
            dimension_semantics=("parallel", "parallel")),
    )(x_tiles, t_w, shift_tiled)


# ----------------------------------------------------------------------------- #
# Kernel 2: classifier MatMul, one grid step per class-column tile (no K padding)
# ----------------------------------------------------------------------------- #
def classifier_kernel(x_ref, w_ref, o_ref):
    o_ref[...] = jnp.dot(x_ref[...], w_ref[...],
                         preferred_element_type=jnp.float32)


def classifier_matmul(x, w, *, cls_tile):
    # x: [N, K] bf16 (NHWC-flattened features), w: [K, Cp] bf16 (rows in (h,w,c) order)
    N, K = x.shape
    _, Cp = w.shape
    return pl.pallas_call(
        classifier_kernel,
        out_shape=jax.ShapeDtypeStruct((N, Cp), jnp.float32),
        grid_spec=pltpu.PrefetchScalarGridSpec(
            num_scalar_prefetch=0,
            grid=(Cp // cls_tile,),
            in_specs=[
                pl.BlockSpec((N, K), lambda j: (0, 0)),
                pl.BlockSpec((K, cls_tile), lambda j: (0, j)),
            ],
            out_specs=pl.BlockSpec((N, cls_tile), lambda j: (0, j)),
        ),
        compiler_params=pltpu.CompilerParams(
            dimension_semantics=("parallel",)),
    )(x, w)


# ----------------------------------------------------------------------------- #
# Parameter setup, forward, pure-JAX reference
# ----------------------------------------------------------------------------- #
def _build_toeplitz(conv_w_scaled, W):
    """Block-Toeplitz matmul form of a 3x3 SAME conv over a padded image row whose
    (w, ci) dims are merged into lanes:
        T[dy, (w+dx)*Cin + ci, w*Cout + co] = w_scaled[co, ci, dy, dx]."""
    cout, cin, kh, kw = conv_w_scaled.shape
    w2 = jnp.arange(W + 2)[:, None]   # padded column index
    wo = jnp.arange(W)[None, :]       # output column index
    blocks = []
    for dy in range(kh):
        tdy = jnp.zeros((W + 2, cin, W, cout), jnp.float32)
        for dx in range(kw):
            sel = (w2 - wo == dx).astype(jnp.float32)          # (W+2, W)
            blk = conv_w_scaled[:, :, dy, dx].T                # (cin, cout)
            tdy = tdy + sel[:, None, :, None] * blk[None, :, None, :]
        blocks.append(tdy.reshape((W + 2) * cin, W * cout))
    return jnp.stack(blocks, axis=0)  # (3, (W+2)*cin, W*cout)


def build_params(key, cin, cout, H, W, num_classes, *, kh=3, kw=3, eps=1e-5):
    k1, k2, k3 = jax.random.split(key, 3)
    # Convolution constant: kaiming_uniform_(a=sqrt(5)) -> bound = 1/sqrt(fan_in)
    fan_in_conv = cin * kh * kw
    b = 1.0 / math.sqrt(fan_in_conv)
    conv_w = jax.random.uniform(k1, (cout, cin, kh, kw), jnp.float32, -b, b)
    # BatchNormInference constants per default init_weight: gamma=1, beta=0, mean=0, var=1
    gamma = jnp.ones((cout,), jnp.float32)
    beta = jnp.zeros((cout,), jnp.float32)
    mean = jnp.zeros((cout,), jnp.float32)
    var = jnp.ones((cout,), jnp.float32)
    # Add constant: uniform(-1/sqrt(fan_in), +1/sqrt(fan_in)) with fan_in = cout
    b_add = 1.0 / math.sqrt(cout)
    add_bias = jax.random.uniform(k2, (cout,), jnp.float32, -b_add, b_add)
    # MatMul constant (kaiming-style uniform), rows in NCHW (c, h, w) flatten order
    F = cout * H * W
    b_fc = 1.0 / math.sqrt(F)
    fc_w = jax.random.uniform(k3, (F, num_classes), jnp.float32, -b_fc, b_fc)

    scale = gamma / jnp.sqrt(var + eps)
    shift = beta - mean * scale + add_bias

    # BN scale folded into the conv weight (in f32, before the bf16 cast); the kernel
    # epilogue only adds `shift` and applies ReLU.
    t_toeplitz = _build_toeplitz(conv_w * scale[:, None, None, None], W)
    shift_tiled = jnp.tile(shift, W).reshape(1, W * cout)

    # Classifier weight permuted ONCE into (h, w, c) row order so it consumes the conv
    # kernel's NHWC-flatten output directly.  Only class columns are padded (for a
    # lane-dense store tile); K is left un-padded.
    cls_pad = _round_up(num_classes, LANE)
    if cls_pad % 512 == 0:
        cls_tile = 512
    elif cls_pad % 256 == 0:
        cls_tile = 256
    else:
        cls_tile = 128
    fc_hwc = jnp.transpose(fc_w.reshape(cout, H, W, num_classes),
                           (1, 2, 0, 3)).reshape(H * W * cout, num_classes)
    fc_p = jnp.zeros((H * W * cout, cls_pad), jnp.float32).at[:, :num_classes].set(fc_hwc)

    return dict(
        # f32 masters for the pure-JAX reference
        conv_w=conv_w, scale=scale, shift=shift, fc_w_nchw=fc_w,
        # kernel operands
        t_toeplitz=t_toeplitz.astype(jnp.bfloat16),
        shift_tiled=shift_tiled,
        fc_p=fc_p.astype(jnp.bfloat16),
        cout=cout, num_classes=num_classes, cls_tile=cls_tile, eps=eps)


def ov_model_forward(x_nchw, params, *, tile_h=None):
    """OVModel.forward for the synthetic graph.  Returns {Result-node: value}."""
    N, Cin, H, W = x_nchw.shape
    cout = params["cout"]
    if tile_h is None:
        tile_h = _pick_tile_h(H)
    n_rt = H // tile_h

    # NHWC + 1-px zero halo, bf16, (w, ci) merged into lanes -> (N, H+2, (W+2)*Cin)
    xp = jnp.pad(jnp.transpose(x_nchw, (0, 2, 3, 1)).astype(jnp.bfloat16),
                 ((0, 0), (1, 1), (1, 1), (0, 0))).reshape(N, H + 2, (W + 2) * Cin)
    # Haloed row tiles (2-row overlap) -> (N, n_rt, tile_h+2, (W+2)*Cin); ~1.25x the
    # input bytes, vs. the 9x (and 128/36 K-padded) im2col patch matrix this replaces.
    x_tiles = jnp.stack([xp[:, r * tile_h: r * tile_h + tile_h + 2, :]
                         for r in range(n_rt)], axis=1)

    feat = conv_bn_add_relu(x_tiles, params["t_toeplitz"], params["shift_tiled"],
                            H=H, tile_h=tile_h)                  # (N*H, W*cout) bf16

    # Already in NHWC (h, w, c) flatten order, no channel padding: a free reshape
    # feeds the (h, w, c)-ordered classifier weight.  No slice, no re-pad.
    flat = feat.reshape(N, H * W * cout)
    logits = classifier_matmul(flat, params["fc_p"], cls_tile=params["cls_tile"])
    return {"logits": logits[:, :params["num_classes"]]}


def ov_model_reference(x_nchw, params):
    """Pure-JAX (f32) reference of the same graph for a correctness check."""
    y = jax.lax.conv_general_dilated(
        x_nchw, params["conv_w"], window_strides=(1, 1), padding="SAME",
        dimension_numbers=("NCHW", "OIHW", "NCHW"))
    s = params["scale"].reshape(1, -1, 1, 1)
    t = params["shift"].reshape(1, -1, 1, 1)
    y = jnp.maximum(y * s + t, 0.0)
    flat = y.reshape(y.shape[0], -1)                             # NCHW flatten
    return {"logits": flat @ params["fc_w_nchw"]}


if __name__ == "__main__":
    key = jax.random.PRNGKey(0)
    kx, kp = jax.random.split(key)

    N, Cin, H, W = 2, 4, 16, 16
    Cout, num_classes = 8, 10

    x = jax.random.normal(kx, (N, Cin, H, W), jnp.float32)
    params = build_params(kp, Cin, Cout, H, W, num_classes)

    out = ov_model_forward(x, params)
    jax.block_until_ready(out["logits"])

    ref = ov_model_reference(x, params)
    assert out["logits"].shape == (N, num_classes)
    # bf16 MXU inputs + bf16 feature roundtrip vs. an all-f32 reference -> loose tol.
    assert jnp.allclose(out["logits"], ref["logits"], atol=3e-2, rtol=3e-2), (
        float(jnp.max(jnp.abs(out["logits"] - ref["logits"]))))

    print("KERNEL_OK")
</pallas_src>

<mosaic_0001>
module attributes {stable_mosaic.version = 11 : i64} {
  func.func @conv_bn_add_relu_kernel(%arg0: i32, %arg1: i32, %arg2: memref<1x1x10x72xbf16, #tpu.memory_space<vmem>>, %arg3: memref<3x72x128xbf16, #tpu.memory_space<vmem>>, %arg4: memref<1x128xf32, #tpu.memory_space<vmem>>, %arg5: memref<8x128xbf16, #tpu.memory_space<vmem>>) attributes {dimension_semantics = [#tpu.dimension_semantics<parallel>, #tpu.dimension_semantics<parallel>], iteration_bounds = array<i64: 2, 2>, scalar_prefetch = 0 : i64, scratch_operands = 0 : i64, tpu.core_type = #tpu.core_type<tc>, window_params = [{transform_indices = @transform_0, window_bounds = array<i64: 1, 1, 10, 72>}, {pipeline_mode = #tpu.pipeline_mode<synchronous>, transform_indices = @transform_1, window_bounds = array<i64: 3, 72, 128>}, {pipeline_mode = #tpu.pipeline_mode<synchronous>, transform_indices = @transform_2, window_bounds = array<i64: 1, 128>}, {transform_indices = @transform_3, window_bounds = array<i64: 8, 128>}]} {
    %c0 = arith.constant 0 : index
    %c0_0 = arith.constant 0 : index
    %c0_1 = arith.constant 0 : index
    %c0_2 = arith.constant 0 : index
    %0 = vector.load %arg2[%c0, %c0_0, %c0_1, %c0_2] : memref<1x1x10x72xbf16, #tpu.memory_space<vmem>>, vector<1x1x10x72xbf16>
    %1 = vector.shape_cast %0 : vector<1x1x10x72xbf16> to vector<10x72xbf16>
    %c0_3 = arith.constant 0 : index
    %c0_4 = arith.constant 0 : index
    %c0_5 = arith.constant 0 : index
    %2 = vector.load %arg3[%c0_3, %c0_4, %c0_5] : memref<3x72x128xbf16, #tpu.memory_space<vmem>>, vector<1x72x128xbf16>
    %3 = vector.shape_cast %2 : vector<1x72x128xbf16> to vector<72x128xbf16>
    %cst = arith.constant dense<0.000000e+00> : vector<10x128xf32>
    %4 = tpu.matmul %1, %3, %cst {dimension_numbers = #tpu.dot_dimension_numbers<[1], [0], [0], [1], [0, 0, 1, 1], [], []>} : vector<10x72xbf16>, vector<72x128xbf16>, vector<10x128xf32> -> vector<10x128xf32>
    %c1 = arith.constant 1 : index
    %c0_6 = arith.constant 0 : index
    %c0_7 = arith.constant 0 : index
    %5 = vector.load %arg3[%c1, %c0_6, %c0_7] : memref<3x72x128xbf16, #tpu.memory_space<vmem>>, vector<1x72x128xbf16>
    %6 = vector.shape_cast %5 : vector<1x72x128xbf16> to vector<72x128xbf16>
    %cst_8 = arith.constant dense<0.000000e+00> : vector<10x128xf32>
    %7 = tpu.matmul %1, %6, %cst_8 {dimension_numbers = #tpu.dot_dimension_numbers<[1], [0], [0], [1], [0, 0, 1, 1], [], []>} : vector<10x72xbf16>, vector<72x128xbf16>, vector<10x128xf32> -> vector<10x128xf32>
    %c2 = arith.constant 2 : index
    %c0_9 = arith.constant 0 : index
    %c0_10 = arith.constant 0 : index
    %8 = vector.load %arg3[%c2, %c0_9, %c0_10] : memref<3x72x128xbf16, #tpu.memory_space<vmem>>, vector<1x72x128xbf16>
    %9 = vector.shape_cast %8 : vector<1x72x128xbf16> to vector<72x128xbf16>
    %cst_11 = arith.constant dense<0.000000e+00> : vector<10x128xf32>
    %10 = tpu.matmul %1, %9, %cst_11 {dimension_numbers = #tpu.dot_dimension_numbers<[1], [0], [0], [1], [0, 0, 1, 1], [], []>} : vector<10x72xbf16>, vector<72x128xbf16>, vector<10x128xf32> -> vector<10x128xf32>
    %11 = vector.extract_strided_slice %4 {offsets = [0, 0], sizes = [8, 128], strides = [1, 1]} : vector<10x128xf32> to vector<8x128xf32>
    %12 = vector.extract_strided_slice %7 {offsets = [1, 0], sizes = [8, 128], strides = [1, 1]} : vector<10x128xf32> to vector<8x128xf32>
    %13 = arith.addf %11, %12 : vector<8x128xf32>
    %14 = vector.extract_strided_slice %10 {offsets = [2, 0], sizes = [8, 128], strides = [1, 1]} : vector<10x128xf32> to vector<8x128xf32>
    %15 = arith.addf %13, %14 : vector<8x128xf32>
    %c0_12 = arith.constant 0 : index
    %c0_13 = arith.constant 0 : index
    %16 = vector.load %arg4[%c0_12, %c0_13] : memref<1x128xf32, #tpu.memory_space<vmem>>, vector<1x128xf32>
    %17 = vector.broadcast %16 : vector<1x128xf32> to vector<8x128xf32>
    %18 = arith.addf %15, %17 : vector<8x128xf32>
    %cst_14 = arith.constant 0.000000e+00 : f32
    %19 = vector.broadcast %cst_14 : f32 to vector<8x128xf32>
    %20 = arith.maximumf %18, %19 : vector<8x128xf32>
    %21 = arith.truncf %20 : vector<8x128xf32> to vector<8x128xbf16>
    %c0_15 = arith.constant 0 : index
    %c0_16 = arith.constant 0 : index
    %22 = vector.load %arg5[%c0_15, %c0_16] : memref<8x128xbf16, #tpu.memory_space<vmem>>, vector<8x128xbf16>
    tpu.vector_store %arg5[%c0_15, %c0_16], %21 {strides = array<i32>} : memref<8x128xbf16, #tpu.memory_space<vmem>>, vector<8x128xbf16>,
    return
  }
  func.func @transform_0(%arg0: i32, %arg1: i32) -> (i32, i32, i32, i32) {
    %c0_i32 = arith.constant 0 : i32
    %c0_i32_0 = arith.constant 0 : i32
    %c0_i32_1 = arith.constant 0 : i32
    return %arg0, %arg1, %c0_i32, %c0_i32_0 : i32, i32, i32, i32
  }
  func.func @transform_1(%arg0: i32, %arg1: i32) -> (i32, i32, i32) {
    %c0_i32 = arith.constant 0 : i32
    %c0_i32_0 = arith.constant 0 : i32
    %c0_i32_1 = arith.constant 0 : i32
    %c0_i32_2 = arith.constant 0 : i32
    return %c0_i32, %c0_i32_0, %c0_i32_1 : i32, i32, i32
  }
  func.func @transform_2(%arg0: i32, %arg1: i32) -> (i32, i32) {
    %c0_i32 = arith.constant 0 : i32
    %c0_i32_0 = arith.constant 0 : i32
    %c0_i32_1 = arith.constant 0 : i32
    return %c0_i32, %c0_i32_0 : i32, i32
  }
  func.func @transform_3(%arg0: i32, %arg1: i32) -> (i32, i32) {
    %c2_i32 = arith.constant 2 : i32
    %0 = arith.muli %arg0, %c2_i32 : i32
    %1 = arith.addi %0, %arg1 : i32
    %c0_i32 = arith.constant 0 : i32
    %c0_i32_0 = arith.constant 0 : i32
    return %1, %c0_i32 : i32, i32
  }
}

</mosaic_0001>

<llo_original>
// kernel: tpu_custom_call.1
$region0: #{tpu_custom_call.1}
  #allocation0 [shape = 'u32[]', space=smem, size = 0x4, offset = 0x4, fixed_abs, tag = 'smem constant byte address 0x4 - core index']
  #allocation1 [shape = 'u32[144,128]{1,0:T(1,128)}', space=vmem, size = 0x12000, scoped, tag = 'internal scratch']
  %s0 = inlined_call_operand.vmem [shape: bf16[2,2,10,72], index: 0, kind: input, shape index: {}]
  %s1 = inlined_call_operand.hbm [shape: bf16[3,72,128], index: 1, kind: input, shape index: {}]
  %s2 = inlined_call_operand.vmem [shape: f32[1,128], index: 2, kind: input, shape index: {}]
  %s3 = inlined_call_operand.hbm [shape: bf16[32,128], index: 3, kind: output, shape index: {}]
  %s4 = sld [smem:[#allocation0]]
  $region49: #{tpu_custom_call.1} parent=0
    _
  %s6 = ssub.s32 1, %s4
  %s7 = scalar_select 0, %s6, %s4
  $region1: #{tpu_custom_call.1} parent=0
    #allocation2 [shape = 'u8[55296]{0}', space=vmem, size = 0xd800, scoped, tag = 'input window, operand 1, single buffered']
    #allocation3 [shape = 's32[2]{0}', space=sflag, size = 0x8, scoped, tag = 'scoped memory for tpu_custom_call.1']
    #allocation4 [shape = 's32[2]{0}', space=sflag, size = 0x8, scoped, tag = 'scoped memory for tpu_custom_call.1']
    #allocation5 [shape = 'u8[4096]{0}', space=vmem, size = 0x1000, scoped, tag = 'output window, operand 0']
    %8 = vsyncpa [#allocation3], 0
    %9 = vsyncpa [#allocation4], 0
    %s10 = scalar_lea.sflag [#allocation4], 1
    %11 = vsyncpa %s10, 0
    loop: start=0, step=1, limit=6
    $region2: #{tpu_custom_call.1} parent=1 // loop_pre_header
      _
    $region3: #{tpu_custom_call.1} parent=1 // loop_header
      %s13 = sphi 0, %s17
      %p14 = scmp.ge.s32.totalorder %s13, 6
      %s20 = sphi 0, %s32
      %s21 = sphi 0, %s28
      %s22 = sphi 0, %s20
      %s23 = sphi 0, %s21
      %s24 = sphi 0, %s22
      %s25 = sphi 0, %s23
      %s37 = sphi 0, %s39
      %s40 = sphi 0, %s37
      %s41 = sphi 0, %s40
      %s57 = sphi 0, %s41
      %s61 = sphi 0, %s61
      %s63 = sphi 0, %s61
      %s64 = sphi 0, %s63
      %s78 = sphi 0, %s64
      %s82 = sphi 0, %s82
      %s84 = sphi 0, %s82
      %s85 = sphi 0, %s84
      %s99 = sphi 0, %s85
      %s109 = sphi 0, %s111
      %s112 = sphi 0, %s109
      %s113 = sphi 0, %s112
      %s129 = sphi 0, %s113
    $region4: #{tpu_custom_call.1} parent=1 // loop_header_branch
      %16 = sbr.rel (%p14) target = $region8
    $region5: #{tpu_custom_call.1} parent=1 // loop_body
      %s18 = ssub.s32 %s13, 1
      %s19 = ssub.s32 %s13, 2
      %s26 = sadd.s32 1, %s21
      %p27 = scmp.ge.s32.totalorder %s26, 2
      %s28 = scalar_select %p27, 0, %s26
      %s29 = sadd.s32 1, %s20
      %s30 = scalar_select %p27, %s29, %s20
      %p31 = scmp.ge.s32.totalorder %s30, 2
      %s32 = scalar_select %p31, 0, %s30
      %s33 = ssub.s32 %s20, %s32
      %s34 = ssub.s32 %s21, %s28
      %s35 = sor.u32 %s33, %s34
      %p36 = scmp.eq.s32.totalorder %s35, 0
      %s38 = sadd.s32 %s37, 1
      %s39 = scalar_select %p36, %s37, %s38
      %p42 = pneg %p36
      %p43 = scmp.eq.s32.totalorder %s13, 3
      %p44 = por %p42, %p43
      %p45 = scmp.ne.s32.totalorder %s37, %s40
      %p46 = scmp.eq.s32.totalorder %s13, 0
      %p47 = por %p45, %p46
      %p48 = scmp.ne.s32.totalorder %s37, %s40
      %p49 = scmp.eq.s32.totalorder %s18, 3
      %p50 = por %p48, %p49
      %p51 = scmp.ne.s32.totalorder %s40, %s41
      %p52 = scmp.eq.s32.totalorder %s18, 0
      %p53 = por %p51, %p52
      %p54 = scmp.ne.s32.totalorder %s40, %s41
      %p55 = scmp.eq.s32.totalorder %s19, 3
      %p56 = por %p54, %p55
      %p58 = scmp.ne.s32.totalorder %s41, %s57
      %p59 = scmp.eq.s32.totalorder %s19, 0
      %p60 = por %p58, %p59
      %s62 = sadd.s32 %s61, 1
      %p65 = scmp.eq.s32.totalorder %s13, 3
      %p66 = scmp.ne.s32.totalorder %s61, %s63
      %p67 = scmp.eq.s32.totalorder %s13, 0
      %p68 = por %p66, %p67
      %p69 = scmp.ne.s32.totalorder %s61, %s63
      %p70 = scmp.eq.s32.totalorder %s18, 3
      %p71 = por %p69, %p70
      %p72 = scmp.ne.s32.totalorder %s63, %s64
      %p73 = scmp.eq.s32.totalorder %s18, 0
      %p74 = por %p72, %p73
      %p75 = scmp.ne.s32.totalorder %s63, %s64
      %p76 = scmp.eq.s32.totalorder %s19, 3
      %p77 = por %p75, %p76
      %p79 = scmp.ne.s32.totalorder %s64, %s78
      %p80 = scmp.eq.s32.totalorder %s19, 0
      %p81 = por %p79, %p80
      %s83 = sadd.s32 %s82, 1
      %p86 = scmp.eq.s32.totalorder %s13, 3
      %p87 = scmp.ne.s32.totalorder %s82, %s84
      %p88 = scmp.eq.s32.totalorder %s13, 0
      %p89 = por %p87, %p88
      %p90 = scmp.ne.s32.totalorder %s82, %s84
      %p91 = scmp.eq.s32.totalorder %s18, 3
      %p92 = por %p90, %p91
      %p93 = scmp.ne.s32.totalorder %s84, %s85
      %p94 = scmp.eq.s32.totalorder %s18, 0
      %p95 = por %p93, %p94
      %p96 = scmp.ne.s32.totalorder %s84, %s85
      %p97 = scmp.eq.s32.totalorder %s19, 3
      %p98 = por %p96, %p97
      %p100 = scmp.ne.s32.totalorder %s85, %s99
      %p101 = scmp.eq.s32.totalorder %s19, 0
      %p102 = por %p100, %p101
      %s103 = smul.u32 %s20, 2
      %s104 = sadd.s32 %s103, %s21
      %s105 = smul.u32 %s32, 2
      %s106 = sadd.s32 %s105, %s28
      %s107 = ssub.s32 %s104, %s106
      %p108 = scmp.eq.s32.totalorder %s107, 0
      %s110 = sadd.s32 %s109, 1
      %s111 = scalar_select %p108, %s109, %s110
      %p114 = pneg %p108
      %p115 = scmp.eq.s32.totalorder %s13, 3
      %p116 = por %p114, %p115
      %p117 = scmp.ne.s32.totalorder %s109, %s112
      %p118 = scmp.eq.s32.totalorder %s13, 0
      %p119 = por %p117, %p118
      %p120 = scmp.ne.s32.totalorder %s109, %s112
      %p121 = scmp.eq.s32.totalorder %s18, 3
      %p122 = por %p120, %p121
      %p123 = scmp.ne.s32.totalorder %s112, %s113
      %p124 = scmp.eq.s32.totalorder %s18, 0
      %p125 = por %p123, %p124
      %p126 = scmp.ne.s32.totalorder %s112, %s113
      %p127 = scmp.eq.s32.totalorder %s19, 3
      %p128 = por %p126, %p127
      %p130 = scmp.ne.s32.totalorder %s113, %s129
      %p131 = scmp.eq.s32.totalorder %s19, 0
      %p132 = por %p130, %p131
      %p133 = scmp.le.s32.totalorder 1, %s13
      %p134 = scmp.lt.s32.totalorder %s13, 5
      %p135 = pnand %p133, %p134
      %p136 = pneg %p135
      // Predicated region
      $region9: #{tpu_custom_call.1} parent=5 // pred_check
        _
      $region10: #{tpu_custom_call.1} parent=5 // pred_check_branch
        %138 = sbr.rel (%p135) target = $region12
      $region11: #{tpu_custom_call.1} parent=5 // pred_region
        %s139 = ssub.s32 %s13, 1
        // Predicated region
        $region13: #{tpu_custom_call.1} parent=11 // pred_check
          %p140 = pneg %p74
        $region14: #{tpu_custom_call.1} parent=11 // pred_check_branch
          %142 = sbr.rel (%p140) target = $region16
        $region15: #{tpu_custom_call.1} parent=11 // pred_region
          %s144 = ssub.s32 1728, 1728
          %145 = vsyncadd [#allocation3], %s144
          %s146 = sshll.u32 [#allocation2], 4
          %s147 = int_to_ptr.vmem [resolvable:$true] %s146
          %152 = dma.hbm_to_vmem [thread:$0]  %s1, 1728, %s147, [#allocation3], 64, 64, 4
        $region16: #{tpu_custom_call.1} parent=11 // pred_fallthru
          _
        // Predicated region
        $region17: #{tpu_custom_call.1} parent=11 // pred_check
          %p153 = pneg %p95
        $region18: #{tpu_custom_call.1} parent=11 // pred_check_branch
          %155 = sbr.rel (%p153) target = $region20
        $region19: #{tpu_custom_call.1} parent=11 // pred_region
          _
        $region20: #{tpu_custom_call.1} parent=11 // pred_fallthru
          _
      $region12: #{tpu_custom_call.1} parent=5 // pred_fallthru
        _
      %p156 = scmp.lt.s32.totalorder %s13, 4
      // Predicated region
      $region21: #{tpu_custom_call.1} parent=5 // pred_check
        %p157 = pneg %p156
      $region22: #{tpu_custom_call.1} parent=5 // pred_check_branch
        %159 = sbr.rel (%p157) target = $region24
      $region23: #{tpu_custom_call.1} parent=5 // pred_region
        // Predicated region
        $region25: #{tpu_custom_call.1} parent=23 // pred_check
          %p160 = pneg %p47
        $region26: #{tpu_custom_call.1} parent=23 // pred_check_branch
          %162 = sbr.rel (%p160) target = $region28
        $region27: #{tpu_custom_call.1} parent=23 // pred_region
          %p163 = scmp.lt.s32.totalorder %s20, 1
          %s164 = scalar_select %p163, %s20, 1
          %p165 = scmp.lt.s32.totalorder %s21, 1
          %s166 = scalar_select %p165, %s21, 1
          %s167 = smul.addr %s166, 2
          %s168 = smul.addr %s164, 4
          %s169 = sadd.s32 %s167, %s168
          %s170 = smul.addr %s169, 4
          %s171 = scalar_lea.vmem %s0, %s170
        $region28: #{tpu_custom_call.1} parent=23 // pred_fallthru
          _
      $region24: #{tpu_custom_call.1} parent=5 // pred_fallthru
        _
      %p172 = scmp.le.s32.totalorder 1, %s13
      %p173 = scmp.lt.s32.totalorder %s13, 5
      %p174 = pnand %p172, %p173
      %p175 = pneg %p174
      // Predicated region
      $region29: #{tpu_custom_call.1} parent=5 // pred_check
        _
      $region30: #{tpu_custom_call.1} parent=5 // pred_check_branch
        %177 = sbr.rel (%p174) target = $region32
      $region31: #{tpu_custom_call.1} parent=5 // pred_region
        %s178 = ssub.s32 %s13, 1
        // Predicated region
        $region33: #{tpu_custom_call.1} parent=31 // pred_check
          %p179 = pneg %p74
        $region34: #{tpu_custom_call.1} parent=31 // pred_check_branch
          %181 = sbr.rel (%p179) target = $region36
        $region35: #{tpu_custom_call.1} parent=31 // pred_region
          %182 = dma.done [#allocation3], 1728
        $region36: #{tpu_custom_call.1} parent=31 // pred_fallthru
          _
        %p183 = scmp.lt.s32.totalorder %s22, 1
        %s184 = scalar_select %p183, %s22, 1
        %p185 = scmp.lt.s32.totalorder %s23, 1
        %s186 = scalar_select %p185, %s23, 1
        %s187 = smul.addr %s186, 2
        %s188 = smul.addr %s184, 4
        %s189 = sadd.s32 %s187, %s188
        %s190 = smul.addr %s189, 4
        %s191 = scalar_lea.vmem %s0, %s190
        %p192 = pneg %p53
        %p193 = pneg %p50
        %p194 = pneg %p74
        %p195 = pneg %p71
        %p196 = pneg %p95
        %p197 = pneg %p92
        %p198 = pneg %p125
        %p199 = pneg %p122
        %s200 = sand.u32 %s112, 1
        %s201 = scalar_lea.sflag [#allocation4], %s200
        %s202 = sand.u32 %s112, 1
        %s203 = smul.addr %s202, 4
        %s204 = scalar_lea.vmem [#allocation5], %s203
        %p205 = scmp.lt.s32.totalorder %s22, 1
        %s206 = scalar_select %p205, %s22, 1
        %p207 = scmp.lt.s32.totalorder %s23, 1
        %s208 = scalar_select %p207, %s23, 1
        %s209 = smul.addr %s208, 2
        %s210 = smul.addr %s206, 4
        %s211 = sadd.s32 %s209, %s210
        %s212 = smul.addr %s211, 4
        %s213 = scalar_lea.vmem %s0, %s212
        %s214 = smul.u32 %s22, 2
        %s215 = sadd.s32 %s214, %s23
        %v217 = vld [vmem:[%s213] sm:$0xf]
        %v218 = vld [vmem:[%s213 + $0x4] sm:$0x1]
        %v219 = vld [vmem:[#allocation2] sm:$0xf]
        %v220 = vld [vmem:[#allocation2 + $0x4] sm:$0xf]
        %v221 = vld [vmem:[#allocation2 + $0x8] sm:$0xf]
        %v222 = vld [vmem:[#allocation2 + $0xc] sm:$0xf]
        %v223 = vld [vmem:[#allocation2 + $0x10] sm:$0xf]
        %v224 = vld [vmem:[#allocation2 + $0x14] sm:$0xf]
        %v225 = vld [vmem:[#allocation2 + $0x18] sm:$0xf]
        %v226 = vld [vmem:[#allocation2 + $0x1c] sm:$0xf]
        %v227 = vld [vmem:[#allocation2 + $0x20] sm:$0xf]
        %v230 = vunpack.c.l.b16 %v217
        %v231 = vunpack.c.l.b16 %v218
        %v232 = vpack.c.b16 %v231, %v230
        %v242 = vunpack.c.l.b16 %v219
        %v243 = vunpack.c.l.b16 %v220
        %v244 = vunpack.c.l.b16 %v221
        %v245 = vunpack.c.l.b16 %v222
        %v246 = vunpack.c.l.b16 %v223
        %v247 = vunpack.c.l.b16 %v224
        %v248 = vunpack.c.l.b16 %v225
        %v249 = vunpack.c.l.b16 %v226
        %v250 = vunpack.c.l.b16 %v227
        %v251 = vpack.c.b16 %v243, %v242
        %v252 = vpack.c.b16 %v245, %v244
        %v253 = vpack.c.b16 %v247, %v246
        %v254 = vpack.c.b16 %v249, %v248
        %v255 = vpack.c.b16 %v250, %v250
        %vm260 = vcmask 588800
        %v262 = vsel %vm260, %v232, 0
        %vm264 = vcmask 1043456
        %v266 = vsel %vm264, %v255, 0
        %268 = vmatprep.subr.bf16.mxu0 0
        %269 = vmatpush1.bf16.msra.mxu0 0
        %270 = vmatprep.subr.bf16.mxu0 0
        %271 = vmatpush1.bf16.msra.mxu0 0
        %272 = vmatprep.subr.bf16.mxu0 0
        %273 = vmatpush1.bf16.msra.mxu0 0
        %274 = vmatprep.subr.bf16.mxu0 0
        %275 = vmatpush1.bf16.msra.mxu0 %v266
        %276 = vmatprep.subr.bf16.mxu0 0
        %277 = vmatpush1.bf16.msra.mxu0 %v254
        %278 = vmatprep.subr.bf16.mxu0 0
        %279 = vmatpush1.bf16.msra.mxu0 %v253
        %280 = vmatprep.subr.bf16.mxu0 0
        %281 = vmatpush1.bf16.msra.mxu0 %v252
        %282 = vmatprep.subr.bf16.mxu0 0
        %283 = vmatpush1.bf16.msra.mxu0 %v251
        %284 = vmatprep.subr.bf16.mxu0 0
        %285 = vmatpush2.bf16.msra.mxu0 0
        %286 = vmatprep.subr.bf16.mxu0 0
        %287 = vmatpush2.bf16.msra.mxu0 0
        %288 = vmatprep.subr.bf16.mxu0 0
        %289 = vmatpush2.bf16.msra.mxu0 0
        %290 = vmatprep.subr.bf16.mxu0 0
        %291 = vmatpush2.bf16.msra.mxu0 0
        %292 = vmatprep.subr.bf16.mxu0 0
        %293 = vmatpush2.bf16.msra.mxu0 0
        %294 = vmatprep.subr.bf16.mxu0 0
        %295 = vmatpush2.bf16.msra.mxu0 0
        %296 = vmatprep.subr.bf16.mxu0 0
        %297 = vmatpush2.bf16.msra.mxu0 0
        %298 = vmatprep.subr.bf16.mxu0 0
        %299 = vmatpush2.bf16.msra.mxu0 0
        %300 = vmatprep.mubr.bf16.mxu0 0
        %301 = vmatmul.mubr.bf16.gmra.mxu0 %v262
        %v302 = vpop.f32.mrf.mxu0
        %v303 = vadd.f32 0.0, %v302
        %v304 = vpop.f32.mrf.mxu0
        %v305 = vpop.f32.mrf.mxu0
        %v306 = vpop.f32.mrf.mxu0
        %307 = vdwg.mxu0
        %s308 = scalar_lea.vmem [#allocation2], 36
        %v309 = vld [vmem:[%s308] sm:$0xf]
        %v310 = vld [vmem:[%s308 + $0x4] sm:$0xf]
        %v311 = vld [vmem:[%s308 + $0x8] sm:$0xf]
        %v312 = vld [vmem:[%s308 + $0xc] sm:$0xf]
        %v313 = vld [vmem:[%s308 + $0x10] sm:$0xf]
        %v314 = vld [vmem:[%s308 + $0x14] sm:$0xf]
        %v315 = vld [vmem:[%s308 + $0x18] sm:$0xf]
        %v316 = vld [vmem:[%s308 + $0x1c] sm:$0xf]
        %v317 = vld [vmem:[%s308 + $0x20] sm:$0xf]
        %v327 = vunpack.c.l.b16 %v309
        %v328 = vunpack.c.l.b16 %v310
        %v329 = vunpack.c.l.b16 %v311
        %v330 = vunpack.c.l.b16 %v312
        %v331 = vunpack.c.l.b16 %v313
        %v332 = vunpack.c.l.b16 %v314
        %v333 = vunpack.c.l.b16 %v315
        %v334 = vunpack.c.l.b16 %v316
        %v335 = vunpack.c.l.b16 %v317
        %v336 = vpack.c.b16 %v328, %v327
        %v337 = vpack.c.b16 %v330, %v329
        %v338 = vpack.c.b16 %v332, %v331
        %v339 = vpack.c.b16 %v334, %v333
        %v340 = vpack.c.b16 %v335, %v335
        %v346 = vsel %vm264, %v340, 0
        %348 = vmatprep.subr.bf16.mxu0 0
        %349 = vmatpush1.bf16.msra.mxu0 0
        %350 = vmatprep.subr.bf16.mxu0 0
        %351 = vmatpush1.bf16.msra.mxu0 0
        %352 = vmatprep.subr.bf16.mxu0 0
        %353 = vmatpush1.bf16.msra.mxu0 0
        %354 = vmatprep.subr.bf16.mxu0 0
        %355 = vmatpush1.bf16.msra.mxu0 %v346
        %356 = vmatprep.subr.bf16.mxu0 0
        %357 = vmatpush1.bf16.msra.mxu0 %v339
        %358 = vmatprep.subr.bf16.mxu0 0
        %359 = vmatpush1.bf16.msra.mxu0 %v338
        %360 = vmatprep.subr.bf16.mxu0 0
        %361 = vmatpush1.bf16.msra.mxu0 %v337
        %362 = vmatprep.subr.bf16.mxu0 0
        %363 = vmatpush1.bf16.msra.mxu0 %v336
        %364 = vmatprep.subr.bf16.mxu0 0
        %365 = vmatpush2.bf16.msra.mxu0 0
        %366 = vmatprep.subr.bf16.mxu0 0
        %367 = vmatpush2.bf16.msra.mxu0 0
        %368 = vmatprep.subr.bf16.mxu0 0
        %369 = vmatpush2.bf16.msra.mxu0 0
        %370 = vmatprep.subr.bf16.mxu0 0
        %371 = vmatpush2.bf16.msra.mxu0 0
        %372 = vmatprep.subr.bf16.mxu0 0
        %373 = vmatpush2.bf16.msra.mxu0 0
        %374 = vmatprep.subr.bf16.mxu0 0
        %375 = vmatpush2.bf16.msra.mxu0 0
        %376 = vmatprep.subr.bf16.mxu0 0
        %377 = vmatpush2.bf16.msra.mxu0 0
        %378 = vmatprep.subr.bf16.mxu0 0
        %379 = vmatpush2.bf16.msra.mxu0 0
        %380 = vmatprep.mubr.bf16.mxu0 0
        %381 = vmatmul.mubr.bf16.gmra.mxu0 %v262
        %v382 = vpop.f32.mrf.mxu0
        %v383 = vadd.f32 0.0, %v382
        %v384 = vpop.f32.mrf.mxu0
        %v385 = vpop.f32.mrf.mxu0
        %v386 = vadd.f32 0.0, %v385
        %v387 = vpop.f32.mrf.mxu0
        %388 = vdwg.mxu0
        %s389 = scalar_lea.vmem [#allocation2], 72
        %v390 = vld [vmem:[%s389] sm:$0xf]
        %v391 = vld [vmem:[%s389 + $0x4] sm:$0xf]
        %v392 = vld [vmem:[%s389 + $0x8] sm:$0xf]
        %v393 = vld [vmem:[%s389 + $0xc] sm:$0xf]
        %v394 = vld [vmem:[%s389 + $0x10] sm:$0xf]
        %v395 = vld [vmem:[%s389 + $0x14] sm:$0xf]
        %v396 = vld [vmem:[%s389 + $0x18] sm:$0xf]
        %v397 = vld [vmem:[%s389 + $0x1c] sm:$0xf]
        %v398 = vld [vmem:[%s389 + $0x20] sm:$0xf]
        %v408 = vunpack.c.l.b16 %v390
        %v409 = vunpack.c.l.b16 %v391
        %v410 = vunpack.c.l.b16 %v392
        %v411 = vunpack.c.l.b16 %v393
        %v412 = vunpack.c.l.b16 %v394
        %v413 = vunpack.c.l.b16 %v395
        %v414 = vunpack.c.l.b16 %v396
        %v415 = vunpack.c.l.b16 %v397
        %v416 = vunpack.c.l.b16 %v398
        %v417 = vpack.c.b16 %v409, %v408
        %v418 = vpack.c.b16 %v411, %v410
        %v419 = vpack.c.b16 %v413, %v412
        %v420 = vpack.c.b16 %v415, %v414
        %v421 = vpack.c.b16 %v416, %v416
        %v427 = vsel %vm264, %v421, 0
        %429 = vmatprep.subr.bf16.mxu0 0
        %430 = vmatpush1.bf16.msra.mxu0 0
        %431 = vmatprep.subr.bf16.mxu0 0
        %432 = vmatpush1.bf16.msra.mxu0 0
        %433 = vmatprep.subr.bf16.mxu0 0
        %434 = vmatpush1.bf16.msra.mxu0 0
        %435 = vmatprep.subr.bf16.mxu0 0
        %436 = vmatpush1.bf16.msra.mxu0 %v427
        %437 = vmatprep.subr.bf16.mxu0 0
        %438 = vmatpush1.bf16.msra.mxu0 %v420
        %439 = vmatprep.subr.bf16.mxu0 0
        %440 = vmatpush1.bf16.msra.mxu0 %v419
        %441 = vmatprep.subr.bf16.mxu0 0
        %442 = vmatpush1.bf16.msra.mxu0 %v418
        %443 = vmatprep.subr.bf16.mxu0 0
        %444 = vmatpush1.bf16.msra.mxu0 %v417
        %445 = vmatprep.subr.bf16.mxu0 0
        %446 = vmatpush2.bf16.msra.mxu0 0
        %447 = vmatprep.subr.bf16.mxu0 0
        %448 = vmatpush2.bf16.msra.mxu0 0
        %449 = vmatprep.subr.bf16.mxu0 0
        %450 = vmatpush2.bf16.msra.mxu0 0
        %451 = vmatprep.subr.bf16.mxu0 0
        %452 = vmatpush2.bf16.msra.mxu0 0
        %453 = vmatprep.subr.bf16.mxu0 0
        %454 = vmatpush2.bf16.msra.mxu0 0
        %455 = vmatprep.subr.bf16.mxu0 0
        %456 = vmatpush2.bf16.msra.mxu0 0
        %457 = vmatprep.subr.bf16.mxu0 0
        %458 = vmatpush2.bf16.msra.mxu0 0
        %459 = vmatprep.subr.bf16.mxu0 0
        %460 = vmatpush2.bf16.msra.mxu0 0
        %461 = vmatprep.mubr.bf16.mxu0 0
        %462 = vmatmul.mubr.bf16.gmra.mxu0 %v262
        %v463 = vpop.f32.mrf.mxu0
        %v464 = vadd.f32 0.0, %v463
        %v465 = vpop.f32.mrf.mxu0
        %v466 = vpop.f32.mrf.mxu0
        %v467 = vadd.f32 0.0, %v466
        %v468 = vpop.f32.mrf.mxu0
        %469 = vdwg.mxu0
        %vm472 = vcmask 1046528
        %v473 = vrot.slane %v383, 1
        %v474 = vrot.slane %v386, 1
        %v475 = vsel %vm472, %v473, %v474
        %v477 = vadd.f32 %v303, %v475
        %vm480 = vcmask 1045504
        %v481 = vrot.slane %v464, 2
        %v482 = vrot.slane %v467, 2
        %v483 = vsel %vm480, %v481, %v482
        %v485 = vadd.f32 %v477, %v483
        %v486 = vld [vmem:[%s2] sm:$0x1]
        %v488 = vlaneseq
        %v489 = vshrl.u32 %v488, 7
        %v490 = vsub.s32 0, %v489
        %v491 = vrot.slane %v486, %v490
        %v493 = vadd.f32 %v485, %v491
        %v494 = vmax.f32 %v493, 0.0
        %v495 = vpack.c.bf16 %v494, %v494
        %496 = vst [vmem:[%s204] sm:$0xf] %v495
        %s497 = sand.u32 %s112, 1
        %s498 = scalar_lea.sflag [#allocation4], %s497
        %s499 = sand.u32 %s112, 1
        %s500 = smul.addr %s499, 4
        %s501 = scalar_lea.vmem [#allocation5], %s500
        // Predicated region
        $region37: #{tpu_custom_call.1} parent=31 // pred_check
          %p502 = pneg %p122
        $region38: #{tpu_custom_call.1} parent=31 // pred_check_branch
          %504 = sbr.rel (%p502) target = $region40
        $region39: #{tpu_custom_call.1} parent=31 // pred_region
          %s505 = smul.u32 %s22, 2
          %s506 = sadd.s32 %s505, %s23
          %s508 = ssub.s32 64, 64
          %509 = vsyncadd %s498, %s508
          %s510 = smul.addr %s506, 64
          %s511 = scalar_lea.hbm %s3, %s510
          %s513 = sshll.u32 %s501, 4
          %s514 = int_to_ptr.vmem [resolvable:$true] %s513
          %516 = dma.vmem_to_hbm [thread:$0]  %s514, 64, %s511, %s498
        $region40: #{tpu_custom_call.1} parent=31 // pred_fallthru
          _
      $region32: #{tpu_custom_call.1} parent=5 // pred_fallthru
        _
      %p517 = scmp.le.s32.totalorder 2, %s13
      // Predicated region
      $region41: #{tpu_custom_call.1} parent=5 // pred_check
        %p518 = pneg %p517
      $region42: #{tpu_custom_call.1} parent=5 // pred_check_branch
        %520 = sbr.rel (%p518) target = $region44
      $region43: #{tpu_custom_call.1} parent=5 // pred_region
        %s521 = ssub.s32 %s13, 2
        // Predicated region
        $region45: #{tpu_custom_call.1} parent=43 // pred_check
          %p522 = pneg %p128
        $region46: #{tpu_custom_call.1} parent=43 // pred_check_branch
          %524 = sbr.rel (%p522) target = $region48
        $region47: #{tpu_custom_call.1} parent=43 // pred_region
          %s525 = sand.u32 %s113, 1
          %s526 = scalar_lea.sflag [#allocation4], %s525
          %s527 = sand.u32 %s113, 1
          %s528 = smul.addr %s527, 4
          %s529 = scalar_lea.vmem [#allocation5], %s528
          %530 = dma.done %s526, 64
        $region48: #{tpu_custom_call.1} parent=43 // pred_fallthru
          _
      $region44: #{tpu_custom_call.1} parent=5 // pred_fallthru
        _
    $region6: #{tpu_custom_call.1} parent=1 // loop_footer
      %s17 = sadd.s32 1, %s13
    $region7: #{tpu_custom_call.1} parent=1 // loop_footer_branch
      %12 = sbr.rel target = $region3
    $region8: #{tpu_custom_call.1} parent=1 // loop_exit
      _
    %531 = vsyncpa [#allocation3], 1
    %s532 = scalar_lea.sflag [#allocation3], 1
    %533 = vsyncpa %s532, 1
    %534 = vsyncpa [#allocation4], 1
    %s535 = scalar_lea.sflag [#allocation4], 1
    %536 = vsyncpa %s535, 1

</llo_original>
